<compile_context>
chip_gen: v7x
topology: tpu7x:2x2x1
jax: 0.10.0
libtpu: 0.0.40
codegen_flags: <defaults>
</compile_context>

<pallas_src>
import functools

import jax
import jax.numpy as jnp
from jax.experimental import pallas as pl
from jax.experimental.pallas import tpu as pltpu

LANE = 128  # TPU lane width.


def _round_up(n, m):
    return (n + m - 1) // m * m


def _choose_batch_tiling(B, tb):
    """Pick (TB, B_pad): TB is a multiple of 128 dividing B_pad, padding is
    minimal, and (when there is enough work) the grid has >= 2 tiles so the
    batch axis can be sharded across both v7x TensorCores."""
    B128 = _round_up(B, LANE)
    n = B128 // LANE
    kmax = max(1, tb // LANE)
    if n == 1:
        return LANE, B128
    # Largest divisor of n giving at least 2 tiles and TB <= tb.
    k = max(d for d in range(1, n // 2 + 1) if n % d == 0 and d <= kmax)
    if 8 * k >= min(kmax, n // 2):
        return k * LANE, B128
    # Awkward batch (e.g. prime multiple of 128): accept a small over-pad to
    # keep tiles large enough to hide per-grid-step overhead.
    k = min(kmax, max(1, n // 8))
    return k * LANE, _round_up(B, k * LANE)


def mlp_kernel(x_ref, w1_ref, b1_ref, w2_ref, b2_ref, w3_ref, b3_ref, out_ref):
    # x arrives fp32 straight from HBM; cast to bf16 in VMEM (free vs. a
    # separate wrapper-side pad+cast pass over x).
    x = x_ref[...].astype(jnp.bfloat16)
    # fc1: bf16 x bf16 -> fp32 accumulate; bias + ReLU in fp32 on the VPU.
    h1 = jnp.dot(x, w1_ref[...], preferred_element_type=jnp.float32)
    h1 = jnp.maximum(h1 + b1_ref[...], 0.0)
    # fc2
    h2 = jnp.dot(h1.astype(jnp.bfloat16), w2_ref[...],
                 preferred_element_type=jnp.float32)
    h2 = jnp.maximum(h2 + b2_ref[...], 0.0)
    # fc3 (no activation); narrow (TB, C) fp32 store.
    out = jnp.dot(h2.astype(jnp.bfloat16), w3_ref[...],
                  preferred_element_type=jnp.float32)
    out_ref[...] = (out + b3_ref[...]).astype(out_ref.dtype)


@functools.partial(jax.jit, static_argnames=("tb",))
def mlp_forward(x, params, *, tb=4096):
    """Fused MLP forward.  x: (B, F) float32.  params hold (in, out) weights:
    w1 (F,64), b1 (1,64), w2 (64,32), b2 (1,32), w3 (32,C), b3 (1,C)."""
    B, F = x.shape
    C = params["w3"].shape[1]
    H1 = _round_up(params["w1"].shape[1], LANE)   # 64  -> 128
    H2 = _round_up(params["w2"].shape[1], LANE)   # 32  -> 128

    # --- pad + cast the (tiny, VMEM-resident) weights -----------------------
    def pad2(a, r, c):
        return jnp.pad(a, ((0, r - a.shape[0]), (0, c - a.shape[1])))

    w1 = pad2(params["w1"], F, H1).astype(jnp.bfloat16)
    b1 = pad2(params["b1"], 1, H1).astype(jnp.float32)
    w2 = pad2(params["w2"], H1, H2).astype(jnp.bfloat16)
    b2 = pad2(params["b2"], 1, H2).astype(jnp.float32)
    w3 = pad2(params["w3"], H2, C).astype(jnp.bfloat16)   # class dim NOT padded
    b3 = params["b3"].astype(jnp.float32)

    # --- batch tiling: minimal row padding, tile divides the padded batch ---
    TB, B_pad = _choose_batch_tiling(B, tb)
    x_p = x if B_pad == B else jnp.pad(x, ((0, B_pad - B), (0, 0)))
    grid = (B_pad // TB,)

    flops = 2 * B_pad * (F * H1 + H1 * H2 + H2 * C)
    bytes_accessed = (
        B_pad * F * 4                                   # x fp32 in
        + (w1.size + w2.size + w3.size) * 2             # bf16 weights
        + (b1.size + b2.size + b3.size) * 4             # fp32 biases
        + B_pad * C * 4                                 # narrow fp32 out
    )

    out = pl.pallas_call(
        mlp_kernel,
        out_shape=jax.ShapeDtypeStruct((B_pad, C), jnp.float32),
        grid_spec=pltpu.PrefetchScalarGridSpec(
            num_scalar_prefetch=0,
            grid=grid,
            in_specs=[
                pl.BlockSpec((TB, F), lambda i: (i, 0)),   # x: streamed
                pl.BlockSpec((F, H1), lambda i: (0, 0)),   # weights/biases:
                pl.BlockSpec((1, H1), lambda i: (0, 0)),   # VMEM-resident
                pl.BlockSpec((H1, H2), lambda i: (0, 0)),
                pl.BlockSpec((1, H2), lambda i: (0, 0)),
                pl.BlockSpec((H2, C), lambda i: (0, 0)),
                pl.BlockSpec((1, C), lambda i: (0, 0)),
            ],
            out_specs=pl.BlockSpec((TB, C), lambda i: (i, 0)),
        ),
        compiler_params=pltpu.CompilerParams(
            dimension_semantics=("parallel",),
            vmem_limit_bytes=48 * 1024 * 1024),
        cost_estimate=pl.CostEstimate(
            flops=flops, transcendentals=0, bytes_accessed=bytes_accessed),
    )(x_p, w1, b1, w2, b2, w3, b3)

    return out if B_pad == B else out[:B]


def init_params(key, num_features, num_classes):
    """nn.Linear-equivalent init; weights stored as (in, out) so the kernel
    computes x @ W without a transpose."""
    dims = [(num_features, 64), (64, 32), (32, num_classes)]
    params = {}
    for i, (fan_in, fan_out) in enumerate(dims, start=1):
        key, kw, kb = jax.random.split(key, 3)
        bound = 1.0 / jnp.sqrt(fan_in)
        params[f"w{i}"] = jax.random.uniform(
            kw, (fan_in, fan_out), jnp.float32, -bound, bound)
        params[f"b{i}"] = jax.random.uniform(
            kb, (1, fan_out), jnp.float32, -bound, bound)
    return params


def reference_forward(x, params):
    """Pure-JAX reference replicating the kernel's mixed precision
    (bf16 matmul operands, fp32 accumulate / bias / ReLU)."""
    def dot_bf16(a, w):
        return jnp.dot(a.astype(jnp.bfloat16), w.astype(jnp.bfloat16),
                       preferred_element_type=jnp.float32)
    h1 = jnp.maximum(dot_bf16(x, params["w1"]) + params["b1"], 0.0)
    h2 = jnp.maximum(dot_bf16(h1, params["w2"]) + params["b2"], 0.0)
    return dot_bf16(h2, params["w3"]) + params["b3"]


if __name__ == "__main__":
    num_features = 16
    num_classes = 10
    batch = 8

    key = jax.random.PRNGKey(0)
    key, kx = jax.random.split(key)
    x = jax.random.normal(kx, (batch, num_features), jnp.float32)
    params = init_params(key, num_features, num_classes)

    out = jax.block_until_ready(mlp_forward(x, params))
    ref = reference_forward(x, params)
    assert out.shape == (batch, num_classes)
    assert jnp.allclose(out, ref, atol=2e-3, rtol=2e-3), (
        jnp.max(jnp.abs(out - ref)))
    print("KERNEL_OK")
</pallas_src>

<mosaic_0001>
module attributes {stable_mosaic.version = 11 : i64} {
  func.func @mlp_kernel(%arg0: i32, %arg1: memref<128x16xf32, #tpu.memory_space<vmem>>, %arg2: memref<16x128xbf16, #tpu.memory_space<vmem>>, %arg3: memref<1x128xf32, #tpu.memory_space<vmem>>, %arg4: memref<128x128xbf16, #tpu.memory_space<vmem>>, %arg5: memref<1x128xf32, #tpu.memory_space<vmem>>, %arg6: memref<128x10xbf16, #tpu.memory_space<vmem>>, %arg7: memref<1x10xf32, #tpu.memory_space<vmem>>, %arg8: memref<128x10xf32, #tpu.memory_space<vmem>>) attributes {dimension_semantics = [#tpu.dimension_semantics<parallel>], iteration_bounds = array<i64: 1>, scalar_prefetch = 0 : i64, scratch_operands = 0 : i64, tpu.core_type = #tpu.core_type<tc>, window_params = [{transform_indices = @transform_0, window_bounds = array<i64: 128, 16>}, {pipeline_mode = #tpu.pipeline_mode<synchronous>, transform_indices = @transform_1, window_bounds = array<i64: 16, 128>}, {pipeline_mode = #tpu.pipeline_mode<synchronous>, transform_indices = @transform_2, window_bounds = array<i64: 1, 128>}, {pipeline_mode = #tpu.pipeline_mode<synchronous>, transform_indices = @transform_3, window_bounds = array<i64: 128, 128>}, {pipeline_mode = #tpu.pipeline_mode<synchronous>, transform_indices = @transform_4, window_bounds = array<i64: 1, 128>}, {pipeline_mode = #tpu.pipeline_mode<synchronous>, transform_indices = @transform_5, window_bounds = array<i64: 128, 10>}, {pipeline_mode = #tpu.pipeline_mode<synchronous>, transform_indices = @transform_6, window_bounds = array<i64: 1, 10>}, {transform_indices = @transform_7, window_bounds = array<i64: 128, 10>}]} {
    %c0 = arith.constant 0 : index
    %c0_0 = arith.constant 0 : index
    %0 = vector.load %arg1[%c0, %c0_0] : memref<128x16xf32, #tpu.memory_space<vmem>>, vector<128x16xf32>
    %1 = arith.truncf %0 : vector<128x16xf32> to vector<128x16xbf16>
    %c0_1 = arith.constant 0 : index
    %c0_2 = arith.constant 0 : index
    %2 = vector.load %arg2[%c0_1, %c0_2] : memref<16x128xbf16, #tpu.memory_space<vmem>>, vector<16x128xbf16>
    %cst = arith.constant dense<0.000000e+00> : vector<128x128xf32>
    %3 = tpu.matmul %1, %2, %cst {dimension_numbers = #tpu.dot_dimension_numbers<[1], [0], [0], [1], [0, 0, 1, 1], [], []>} : vector<128x16xbf16>, vector<16x128xbf16>, vector<128x128xf32> -> vector<128x128xf32>
    %c0_3 = arith.constant 0 : index
    %c0_4 = arith.constant 0 : index
    %4 = vector.load %arg3[%c0_3, %c0_4] : memref<1x128xf32, #tpu.memory_space<vmem>>, vector<1x128xf32>
    %5 = vector.broadcast %4 : vector<1x128xf32> to vector<128x128xf32>
    %6 = arith.addf %3, %5 : vector<128x128xf32>
    %cst_5 = arith.constant 0.000000e+00 : f32
    %7 = vector.broadcast %cst_5 : f32 to vector<128x128xf32>
    %8 = arith.maximumf %6, %7 : vector<128x128xf32>
    %9 = arith.truncf %8 : vector<128x128xf32> to vector<128x128xbf16>
    %c0_6 = arith.constant 0 : index
    %c0_7 = arith.constant 0 : index
    %10 = vector.load %arg4[%c0_6, %c0_7] : memref<128x128xbf16, #tpu.memory_space<vmem>>, vector<128x128xbf16>
    %cst_8 = arith.constant dense<0.000000e+00> : vector<128x128xf32>
    %11 = tpu.matmul %9, %10, %cst_8 {dimension_numbers = #tpu.dot_dimension_numbers<[1], [0], [0], [1], [0, 0, 1, 1], [], []>} : vector<128x128xbf16>, vector<128x128xbf16>, vector<128x128xf32> -> vector<128x128xf32>
    %c0_9 = arith.constant 0 : index
    %c0_10 = arith.constant 0 : index
    %12 = vector.load %arg5[%c0_9, %c0_10] : memref<1x128xf32, #tpu.memory_space<vmem>>, vector<1x128xf32>
    %13 = vector.broadcast %12 : vector<1x128xf32> to vector<128x128xf32>
    %14 = arith.addf %11, %13 : vector<128x128xf32>
    %cst_11 = arith.constant 0.000000e+00 : f32
    %15 = vector.broadcast %cst_11 : f32 to vector<128x128xf32>
    %16 = arith.maximumf %14, %15 : vector<128x128xf32>
    %17 = arith.truncf %16 : vector<128x128xf32> to vector<128x128xbf16>
    %c0_12 = arith.constant 0 : index
    %c0_13 = arith.constant 0 : index
    %18 = vector.load %arg6[%c0_12, %c0_13] : memref<128x10xbf16, #tpu.memory_space<vmem>>, vector<128x10xbf16>
    %cst_14 = arith.constant dense<0.000000e+00> : vector<128x10xf32>
    %19 = tpu.matmul %17, %18, %cst_14 {dimension_numbers = #tpu.dot_dimension_numbers<[1], [0], [0], [1], [0, 0, 1, 1], [], []>} : vector<128x128xbf16>, vector<128x10xbf16>, vector<128x10xf32> -> vector<128x10xf32>
    %c0_15 = arith.constant 0 : index
    %c0_16 = arith.constant 0 : index
    %20 = vector.load %arg7[%c0_15, %c0_16] : memref<1x10xf32, #tpu.memory_space<vmem>>, vector<1x10xf32>
    %21 = vector.broadcast %20 : vector<1x10xf32> to vector<128x10xf32>
    %22 = arith.addf %19, %21 : vector<128x10xf32>
    %c0_17 = arith.constant 0 : index
    %c0_18 = arith.constant 0 : index
    %23 = vector.load %arg8[%c0_17, %c0_18] : memref<128x10xf32, #tpu.memory_space<vmem>>, vector<128x10xf32>
    tpu.vector_store %arg8[%c0_17, %c0_18], %22 {strides = array<i32>} : memref<128x10xf32, #tpu.memory_space<vmem>>, vector<128x10xf32>,
    return
  }
  func.func @transform_0(%arg0: i32) -> (i32, i32) {
    %c0_i32 = arith.constant 0 : i32
    %c0_i32_0 = arith.constant 0 : i32
    return %arg0, %c0_i32 : i32, i32
  }
  func.func @transform_1(%arg0: i32) -> (i32, i32) {
    %c0_i32 = arith.constant 0 : i32
    %c0_i32_0 = arith.constant 0 : i32
    %c0_i32_1 = arith.constant 0 : i32
    return %c0_i32, %c0_i32_0 : i32, i32
  }
  func.func @transform_2(%arg0: i32) -> (i32, i32) {
    %c0_i32 = arith.constant 0 : i32
    %c0_i32_0 = arith.constant 0 : i32
    %c0_i32_1 = arith.constant 0 : i32
    return %c0_i32, %c0_i32_0 : i32, i32
  }
  func.func @transform_3(%arg0: i32) -> (i32, i32) {
    %c0_i32 = arith.constant 0 : i32
    %c0_i32_0 = arith.constant 0 : i32
    %c0_i32_1 = arith.constant 0 : i32
    return %c0_i32, %c0_i32_0 : i32, i32
  }
  func.func @transform_4(%arg0: i32) -> (i32, i32) {
    %c0_i32 = arith.constant 0 : i32
    %c0_i32_0 = arith.constant 0 : i32
    %c0_i32_1 = arith.constant 0 : i32
    return %c0_i32, %c0_i32_0 : i32, i32
  }
  func.func @transform_5(%arg0: i32) -> (i32, i32) {
    %c0_i32 = arith.constant 0 : i32
    %c0_i32_0 = arith.constant 0 : i32
    %c0_i32_1 = arith.constant 0 : i32
    return %c0_i32, %c0_i32_0 : i32, i32
  }
  func.func @transform_6(%arg0: i32) -> (i32, i32) {
    %c0_i32 = arith.constant 0 : i32
    %c0_i32_0 = arith.constant 0 : i32
    %c0_i32_1 = arith.constant 0 : i32
    return %c0_i32, %c0_i32_0 : i32, i32
  }
  func.func @transform_7(%arg0: i32) -> (i32, i32) {
    %c0_i32 = arith.constant 0 : i32
    %c0_i32_0 = arith.constant 0 : i32
    return %arg0, %c0_i32 : i32, i32
  }
}

</mosaic_0001>

<llo_original>
// kernel: mlp_forward.1
$region0: #{mlp_forward.1}
  #allocation0 [shape = 'u32[]', space=smem, size = 0x4, offset = 0x4, fixed_abs, tag = 'smem constant byte address 0x4 - core index']
  #allocation1 [shape = 'u32[144,128]{1,0:T(1,128)}', space=vmem, size = 0x12000, scoped, tag = 'internal scratch']
  %s0 = inlined_call_operand.vmem [shape: f32[128,16], index: 0, kind: input, shape index: {}]
  %s1 = inlined_call_operand.vmem [shape: bf16[16,128], index: 1, kind: input, shape index: {}]
  %s2 = inlined_call_operand.vmem [shape: f32[1,128], index: 2, kind: input, shape index: {}]
  %s3 = inlined_call_operand.vmem [shape: bf16[128,128], index: 3, kind: input, shape index: {}]
  %s4 = inlined_call_operand.vmem [shape: f32[1,128], index: 4, kind: input, shape index: {}]
  %s5 = inlined_call_operand.vmem [shape: bf16[128,10], index: 5, kind: input, shape index: {}]
  %s6 = inlined_call_operand.vmem [shape: f32[1,10], index: 6, kind: input, shape index: {}]
  %s7 = inlined_call_operand.vmem [shape: f32[128,10], index: 7, kind: output, shape index: {}]
  %s8 = sld [smem:[#allocation0]]
  $region38: #{mlp_forward.1} parent=0
    _
  %s10 = ssub.s32 1, %s8
  %s11 = scalar_select 0, %s10, %s8
  // Predicated region
  $region2: #{mlp_forward.1} parent=0 // pred_check
    _
  $region3: #{mlp_forward.1} parent=0 // pred_check_branch
    %13 = sbr.rel (0) target = $region5
  $region4: #{mlp_forward.1} parent=0 // pred_region
    _
  $region5: #{mlp_forward.1} parent=0 // pred_fallthru
    _
  // Predicated region
  $region6: #{mlp_forward.1} parent=0 // pred_check
    _
  $region7: #{mlp_forward.1} parent=0 // pred_check_branch
    %15 = sbr.rel (0) target = $region9
  $region8: #{mlp_forward.1} parent=0 // pred_region
    _
  $region9: #{mlp_forward.1} parent=0 // pred_fallthru
    _
  // Predicated region
  $region10: #{mlp_forward.1} parent=0 // pred_check
    _
  $region11: #{mlp_forward.1} parent=0 // pred_check_branch
    %17 = sbr.rel (0) target = $region13
  $region12: #{mlp_forward.1} parent=0 // pred_region
    _
  $region13: #{mlp_forward.1} parent=0 // pred_fallthru
    _
  // Predicated region
  $region14: #{mlp_forward.1} parent=0 // pred_check
    _
  $region15: #{mlp_forward.1} parent=0 // pred_check_branch
    %19 = sbr.rel (0) target = $region17
  $region16: #{mlp_forward.1} parent=0 // pred_region
    _
  $region17: #{mlp_forward.1} parent=0 // pred_fallthru
    _
  // Predicated region
  $region18: #{mlp_forward.1} parent=0 // pred_check
    _
  $region19: #{mlp_forward.1} parent=0 // pred_check_branch
    %21 = sbr.rel (0) target = $region21
  $region20: #{mlp_forward.1} parent=0 // pred_region
    _
  $region21: #{mlp_forward.1} parent=0 // pred_fallthru
    _
  // Predicated region
  $region22: #{mlp_forward.1} parent=0 // pred_check
    _
  $region23: #{mlp_forward.1} parent=0 // pred_check_branch
    %23 = sbr.rel (0) target = $region25
  $region24: #{mlp_forward.1} parent=0 // pred_region
    _
  $region25: #{mlp_forward.1} parent=0 // pred_fallthru
    _
  // Predicated region
  $region26: #{mlp_forward.1} parent=0 // pred_check
    _
  $region27: #{mlp_forward.1} parent=0 // pred_check_branch
    %25 = sbr.rel (0) target = $region29
  $region28: #{mlp_forward.1} parent=0 // pred_region
    _
  $region29: #{mlp_forward.1} parent=0 // pred_fallthru
    _
  %v27 = vld [vmem:[%s0] sm:$0xff]
  %v28 = vld [vmem:[%s0 + $0x8] sm:$0xff]
  %v29 = vld [vmem:[%s0 + $0x10] sm:$0xff]
  %v30 = vld [vmem:[%s0 + $0x18] sm:$0xff]
  %v31 = vld [vmem:[%s0 + $0x20] sm:$0xff]
  %v32 = vld [vmem:[%s0 + $0x28] sm:$0xff]
  %v33 = vld [vmem:[%s0 + $0x30] sm:$0xff]
  %v34 = vld [vmem:[%s0 + $0x38] sm:$0xff]
  %v35 = vld [vmem:[%s0 + $0x40] sm:$0xff]
  %v36 = vld [vmem:[%s0 + $0x48] sm:$0xff]
  %v37 = vld [vmem:[%s0 + $0x50] sm:$0xff]
  %v38 = vld [vmem:[%s0 + $0x58] sm:$0xff]
  %v39 = vld [vmem:[%s0 + $0x60] sm:$0xff]
  %v40 = vld [vmem:[%s0 + $0x68] sm:$0xff]
  %v41 = vld [vmem:[%s0 + $0x70] sm:$0xff]
  %v42 = vld [vmem:[%s0 + $0x78] sm:$0xff]
  %v43 = vpack.c.bf16 %v28, %v27
  %v44 = vpack.c.bf16 %v30, %v29
  %v45 = vpack.c.bf16 %v32, %v31
  %v46 = vpack.c.bf16 %v34, %v33
  %v47 = vpack.c.bf16 %v36, %v35
  %v48 = vpack.c.bf16 %v38, %v37
  %v49 = vpack.c.bf16 %v40, %v39
  %v50 = vpack.c.bf16 %v42, %v41
  %v51 = vld [vmem:[%s1] sm:$0xf]
  %v52 = vld [vmem:[%s1 + $0x4] sm:$0xf]
  %v53 = vld [vmem:[%s2] sm:$0x1]
  %v55 = vlaneseq
  %v56 = vshrl.u32 %v55, 7
  %v57 = vsub.s32 0, %v56
  %v58 = vrot.slane %v53, %v57
  %v62 = vunpack.c.l.b16 %v51
  %v63 = vunpack.c.l.b16 %v52
  %v64 = vpack.c.b16 %v63, %v62
  %vm66 = vcmask 130048
  %v68 = vsel %vm66, %v43, 0
  %v71 = vsel %vm66, %v44, 0
  %v74 = vsel %vm66, %v45, 0
  %v77 = vsel %vm66, %v46, 0
  %v80 = vsel %vm66, %v47, 0
  %v83 = vsel %vm66, %v48, 0
  %v86 = vsel %vm66, %v49, 0
  %v89 = vsel %vm66, %v50, 0
  %91 = vmatprep.subr.bf16.mxu0 0
  %92 = vmatpush1.bf16.msra.mxu0 %v64
  %93 = vmatprep.subr.bf16.mxu0 0
  %94 = vmatpush1.bf16.msra.mxu0 0
  %95 = vmatprep.subr.bf16.mxu0 0
  %96 = vmatpush1.bf16.msra.mxu0 0
  %97 = vmatprep.subr.bf16.mxu0 0
  %98 = vmatpush1.bf16.msra.mxu0 0
  %99 = vmatprep.subr.bf16.mxu0 0
  %100 = vmatpush1.bf16.msra.mxu0 0
  %101 = vmatprep.subr.bf16.mxu0 0
  %102 = vmatpush1.bf16.msra.mxu0 0
  %103 = vmatprep.subr.bf16.mxu0 0
  %104 = vmatpush1.bf16.msra.mxu0 0
  %105 = vmatprep.subr.bf16.mxu0 0
  %106 = vmatpush1.bf16.msra.mxu0 0
  %107 = vmatprep.subr.bf16.mxu0 0
  %108 = vmatpush1.bf16.msra.mxu0 0
  %109 = vmatprep.subr.bf16.mxu0 0
  %110 = vmatpush1.bf16.msra.mxu0 0
  %111 = vmatprep.subr.bf16.mxu0 0
  %112 = vmatpush1.bf16.msra.mxu0 0
  %113 = vmatprep.subr.bf16.mxu0 0
  %114 = vmatpush1.bf16.msra.mxu0 0
  %115 = vmatprep.subr.bf16.mxu0 0
  %116 = vmatpush1.bf16.msra.mxu0 0
  %117 = vmatprep.subr.bf16.mxu0 0
  %118 = vmatpush1.bf16.msra.mxu0 0
  %119 = vmatprep.subr.bf16.mxu0 0
  %120 = vmatpush1.bf16.msra.mxu0 0
  %121 = vmatprep.subr.bf16.mxu0 0
  %122 = vmatpush1.bf16.msra.mxu0 0
  %123 = vmatprep.mubr.bf16.mxu0 0
  %124 = vmatmul.mubr.bf16.gmra.mrb[0].mxu0 %v68
  %v125 = vpop.f32.mrb[0].mxu0
  %v126 = vadd.f32 %v58, %v125
  %v127 = vpop.f32.mrb[0].mxu0
  %v128 = vpop.f32.mrb[0].mxu0
  %v129 = vadd.f32 %v58, %v128
  %v130 = vpop.f32.mrb[0].mxu0
  %131 = vmatprep.mubr.bf16.mxu0 0
  %132 = vmatmul.mubr.bf16.gmra.mrb[0].mxu0 %v71
  %v133 = vpop.f32.mrb[0].mxu0
  %v134 = vadd.f32 %v58, %v133
  %v135 = vpop.f32.mrb[0].mxu0
  %v136 = vpop.f32.mrb[0].mxu0
  %v137 = vadd.f32 %v58, %v136
  %v138 = vpop.f32.mrb[0].mxu0
  %139 = vmatprep.mubr.bf16.mxu0 0
  %140 = vmatmul.mubr.bf16.gmra.mrb[0].mxu0 %v74
  %v141 = vpop.f32.mrb[0].mxu0
  %v142 = vadd.f32 %v58, %v141
  %v143 = vpop.f32.mrb[0].mxu0
  %v144 = vpop.f32.mrb[0].mxu0
  %v145 = vadd.f32 %v58, %v144
  %v146 = vpop.f32.mrb[0].mxu0
  %147 = vmatprep.mubr.bf16.mxu0 0
  %148 = vmatmul.mubr.bf16.gmra.mrb[0].mxu0 %v77
  %v149 = vpop.f32.mrb[0].mxu0
  %v150 = vadd.f32 %v58, %v149
  %v151 = vpop.f32.mrb[0].mxu0
  %v152 = vpop.f32.mrb[0].mxu0
  %v153 = vadd.f32 %v58, %v152
  %v154 = vpop.f32.mrb[0].mxu0
  %155 = vmatprep.mubr.bf16.mxu0 0
  %156 = vmatmul.mubr.bf16.gmra.mrb[0].mxu0 %v80
  %v157 = vpop.f32.mrb[0].mxu0
  %v158 = vadd.f32 %v58, %v157
  %v159 = vpop.f32.mrb[0].mxu0
  %v160 = vpop.f32.mrb[0].mxu0
  %v161 = vadd.f32 %v58, %v160
  %v162 = vpop.f32.mrb[0].mxu0
  %163 = vmatprep.mubr.bf16.mxu0 0
  %164 = vmatmul.mubr.bf16.gmra.mrb[0].mxu0 %v83
  %v165 = vpop.f32.mrb[0].mxu0
  %v166 = vadd.f32 %v58, %v165
  %v167 = vpop.f32.mrb[0].mxu0
  %v168 = vpop.f32.mrb[0].mxu0
  %v169 = vadd.f32 %v58, %v168
  %v170 = vpop.f32.mrb[0].mxu0
  %171 = vmatprep.mubr.bf16.mxu0 0
  %172 = vmatmul.mubr.bf16.gmra.mrb[0].mxu0 %v86
  %v173 = vpop.f32.mrb[0].mxu0
  %v174 = vadd.f32 %v58, %v173
  %v175 = vpop.f32.mrb[0].mxu0
  %v176 = vpop.f32.mrb[0].mxu0
  %v177 = vadd.f32 %v58, %v176
  %v178 = vpop.f32.mrb[0].mxu0
  %179 = vmatprep.mubr.bf16.mxu0 0
  %180 = vmatmul.mubr.bf16.gmra.mrb[0].mxu0 %v89
  %v181 = vpop.f32.mrb[0].mxu0
  %v182 = vadd.f32 %v58, %v181
  %v183 = vpop.f32.mrb[0].mxu0
  %v184 = vpop.f32.mrb[0].mxu0
  %v185 = vadd.f32 %v58, %v184
  %v186 = vpop.f32.mrb[0].mxu0
  %187 = vdwg.mxu0
  %v188 = vmax.f32 %v126, 0.0
  %v189 = vmax.f32 %v129, 0.0
  %v190 = vmax.f32 %v134, 0.0
  %v191 = vmax.f32 %v137, 0.0
  %v192 = vmax.f32 %v142, 0.0
  %v193 = vmax.f32 %v145, 0.0
  %v194 = vmax.f32 %v150, 0.0
  %v195 = vmax.f32 %v153, 0.0
  %v196 = vmax.f32 %v158, 0.0
  %v197 = vmax.f32 %v161, 0.0
  %v198 = vmax.f32 %v166, 0.0
  %v199 = vmax.f32 %v169, 0.0
  %v200 = vmax.f32 %v174, 0.0
  %v201 = vmax.f32 %v177, 0.0
  %v202 = vmax.f32 %v182, 0.0
  %v203 = vmax.f32 %v185, 0.0
  %v204 = vpack.c.bf16 %v189, %v188
  %v205 = vpack.c.bf16 %v191, %v190
  %v206 = vpack.c.bf16 %v193, %v192
  %v207 = vpack.c.bf16 %v195, %v194
  %v208 = vpack.c.bf16 %v197, %v196
  %v209 = vpack.c.bf16 %v199, %v198
  %v210 = vpack.c.bf16 %v201, %v200
  %v211 = vpack.c.bf16 %v203, %v202
  %v212 = vld [vmem:[%s3] sm:$0xf]
  %v213 = vld [vmem:[%s3 + $0x4] sm:$0xf]
  %v214 = vld [vmem:[%s3 + $0x8] sm:$0xf]
  %v215 = vld [vmem:[%s3 + $0xc] sm:$0xf]
  %v216 = vld [vmem:[%s3 + $0x10] sm:$0xf]
  %v217 = vld [vmem:[%s3 + $0x14] sm:$0xf]
  %v218 = vld [vmem:[%s3 + $0x18] sm:$0xf]
  %v219 = vld [vmem:[%s3 + $0x1c] sm:$0xf]
  %v220 = vld [vmem:[%s3 + $0x20] sm:$0xf]
  %v221 = vld [vmem:[%s3 + $0x24] sm:$0xf]
  %v222 = vld [vmem:[%s3 + $0x28] sm:$0xf]
  %v223 = vld [vmem:[%s3 + $0x2c] sm:$0xf]
  %v224 = vld [vmem:[%s3 + $0x30] sm:$0xf]
  %v225 = vld [vmem:[%s3 + $0x34] sm:$0xf]
  %v226 = vld [vmem:[%s3 + $0x38] sm:$0xf]
  %v227 = vld [vmem:[%s3 + $0x3c] sm:$0xf]
  %v228 = vld [vmem:[%s4] sm:$0x1]
  %v230 = vlaneseq
  %v231 = vshrl.u32 %v230, 7
  %v232 = vsub.s32 0, %v231
  %v233 = vrot.slane %v228, %v232
  %v251 = vunpack.c.l.b16 %v212
  %v252 = vunpack.c.l.b16 %v213
  %v253 = vunpack.c.l.b16 %v214
  %v254 = vunpack.c.l.b16 %v215
  %v255 = vunpack.c.l.b16 %v216
  %v256 = vunpack.c.l.b16 %v217
  %v257 = vunpack.c.l.b16 %v218
  %v258 = vunpack.c.l.b16 %v219
  %v259 = vunpack.c.l.b16 %v220
  %v260 = vunpack.c.l.b16 %v221
  %v261 = vunpack.c.l.b16 %v222
  %v262 = vunpack.c.l.b16 %v223
  %v263 = vunpack.c.l.b16 %v224
  %v264 = vunpack.c.l.b16 %v225
  %v265 = vunpack.c.l.b16 %v226
  %v266 = vunpack.c.l.b16 %v227
  %v267 = vpack.c.b16 %v252, %v251
  %v268 = vpack.c.b16 %v254, %v253
  %v269 = vpack.c.b16 %v256, %v255
  %v270 = vpack.c.b16 %v258, %v257
  %v271 = vpack.c.b16 %v260, %v259
  %v272 = vpack.c.b16 %v262, %v261
  %v273 = vpack.c.b16 %v264, %v263
  %v274 = vpack.c.b16 %v266, %v265
  %283 = vmatprep.subr.bf16.mxu0 0
  %284 = vmatpush1.bf16.msra.mxu0 %v267
  %285 = vmatprep.subr.bf16.mxu0 0
  %286 = vmatpush1.bf16.msra.mxu0 %v268
  %287 = vmatprep.subr.bf16.mxu0 0
  %288 = vmatpush1.bf16.msra.mxu0 %v269
  %289 = vmatprep.subr.bf16.mxu0 0
  %290 = vmatpush1.bf16.msra.mxu0 %v270
  %291 = vmatprep.subr.bf16.mxu0 0
  %292 = vmatpush1.bf16.msra.mxu0 %v271
  %293 = vmatprep.subr.bf16.mxu0 0
  %294 = vmatpush1.bf16.msra.mxu0 %v272
  %295 = vmatprep.subr.bf16.mxu0 0
  %296 = vmatpush1.bf16.msra.mxu0 %v273
  %297 = vmatprep.subr.bf16.mxu0 0
  %298 = vmatpush1.bf16.msra.mxu0 %v274
  %299 = vmatprep.subr.bf16.mxu0 0
  %300 = vmatpush1.bf16.msra.mxu0 0
  %301 = vmatprep.subr.bf16.mxu0 0
  %302 = vmatpush1.bf16.msra.mxu0 0
  %303 = vmatprep.subr.bf16.mxu0 0
  %304 = vmatpush1.bf16.msra.mxu0 0
  %305 = vmatprep.subr.bf16.mxu0 0
  %306 = vmatpush1.bf16.msra.mxu0 0
  %307 = vmatprep.subr.bf16.mxu0 0
  %308 = vmatpush1.bf16.msra.mxu0 0
  %309 = vmatprep.subr.bf16.mxu0 0
  %310 = vmatpush1.bf16.msra.mxu0 0
  %311 = vmatprep.subr.bf16.mxu0 0
  %312 = vmatpush1.bf16.msra.mxu0 0
  %313 = vmatprep.subr.bf16.mxu0 0
  %314 = vmatpush1.bf16.msra.mxu0 0
  %315 = vmatprep.mubr.bf16.mxu0 0
  %316 = vmatmul.mubr.bf16.gmra.mrb[0].mxu0 %v204
  %v317 = vpop.f32.mrb[0].mxu0
  %v318 = vadd.f32 %v233, %v317
  %v319 = vpop.f32.mrb[0].mxu0
  %v320 = vpop.f32.mrb[0].mxu0
  %v321 = vadd.f32 %v233, %v320
  %v322 = vpop.f32.mrb[0].mxu0
  %323 = vmatprep.mubr.bf16.mxu0 0
  %324 = vmatmul.mubr.bf16.gmra.mrb[0].mxu0 %v205
  %v325 = vpop.f32.mrb[0].mxu0
  %v326 = vadd.f32 %v233, %v325
  %v327 = vpop.f32.mrb[0].mxu0
  %v328 = vpop.f32.mrb[0].mxu0
  %v329 = vadd.f32 %v233, %v328
  %v330 = vpop.f32.mrb[0].mxu0
  %331 = vmatprep.mubr.bf16.mxu0 0
  %332 = vmatmul.mubr.bf16.gmra.mrb[0].mxu0 %v206
  %v333 = vpop.f32.mrb[0].mxu0
  %v334 = vadd.f32 %v233, %v333
  %v335 = vpop.f32.mrb[0].mxu0
  %v336 = vpop.f32.mrb[0].mxu0
  %v337 = vadd.f32 %v233, %v336
  %v338 = vpop.f32.mrb[0].mxu0
  %339 = vmatprep.mubr.bf16.mxu0 0
  %340 = vmatmul.mubr.bf16.gmra.mrb[0].mxu0 %v207
  %v341 = vpop.f32.mrb[0].mxu0
  %v342 = vadd.f32 %v233, %v341
  %v343 = vpop.f32.mrb[0].mxu0
  %v344 = vpop.f32.mrb[0].mxu0
  %v345 = vadd.f32 %v233, %v344
  %v346 = vpop.f32.mrb[0].mxu0
  %347 = vmatprep.mubr.bf16.mxu0 0
  %348 = vmatmul.mubr.bf16.gmra.mrb[0].mxu0 %v208
  %v349 = vpop.f32.mrb[0].mxu0
  %v350 = vadd.f32 %v233, %v349
  %v351 = vpop.f32.mrb[0].mxu0
  %v352 = vpop.f32.mrb[0].mxu0
  %v353 = vadd.f32 %v233, %v352
  %v354 = vpop.f32.mrb[0].mxu0
  %355 = vmatprep.mubr.bf16.mxu0 0
  %356 = vmatmul.mubr.bf16.gmra.mrb[0].mxu0 %v209
  %v357 = vpop.f32.mrb[0].mxu0
  %v358 = vadd.f32 %v233, %v357
  %v359 = vpop.f32.mrb[0].mxu0
  %v360 = vpop.f32.mrb[0].mxu0
  %v361 = vadd.f32 %v233, %v360
  %v362 = vpop.f32.mrb[0].mxu0
  %363 = vmatprep.mubr.bf16.mxu0 0
  %364 = vmatmul.mubr.bf16.gmra.mrb[0].mxu0 %v210
  %v365 = vpop.f32.mrb[0].mxu0
  %v366 = vadd.f32 %v233, %v365
  %v367 = vpop.f32.mrb[0].mxu0
  %v368 = vpop.f32.mrb[0].mxu0
  %v369 = vadd.f32 %v233, %v368
  %v370 = vpop.f32.mrb[0].mxu0
  %371 = vmatprep.mubr.bf16.mxu0 0
  %372 = vmatmul.mubr.bf16.gmra.mrb[0].mxu0 %v211
  %v373 = vpop.f32.mrb[0].mxu0
  %v374 = vadd.f32 %v233, %v373
  %v375 = vpop.f32.mrb[0].mxu0
  %v376 = vpop.f32.mrb[0].mxu0
  %v377 = vadd.f32 %v233, %v376
  %v378 = vpop.f32.mrb[0].mxu0
  %379 = vdwg.mxu0
  %v380 = vmax.f32 %v318, 0.0
  %v381 = vmax.f32 %v321, 0.0
  %v382 = vmax.f32 %v326, 0.0
  %v383 = vmax.f32 %v329, 0.0
  %v384 = vmax.f32 %v334, 0.0
  %v385 = vmax.f32 %v337, 0.0
  %v386 = vmax.f32 %v342, 0.0
  %v387 = vmax.f32 %v345, 0.0
  %v388 = vmax.f32 %v350, 0.0
  %v389 = vmax.f32 %v353, 0.0
  %v390 = vmax.f32 %v358, 0.0
  %v391 = vmax.f32 %v361, 0.0
  %v392 = vmax.f32 %v366, 0.0
  %v393 = vmax.f32 %v369, 0.0
  %v394 = vmax.f32 %v374, 0.0
  %v395 = vmax.f32 %v377, 0.0
  %v396 = vpack.c.bf16 %v381, %v380
  %v397 = vpack.c.bf16 %v383, %v382
  %v398 = vpack.c.bf16 %v385, %v384
  %v399 = vpack.c.bf16 %v387, %v386
  %v400 = vpack.c.bf16 %v389, %v388
  %v401 = vpack.c.bf16 %v391, %v390
  %v402 = vpack.c.bf16 %v393, %v392
  %v403 = vpack.c.bf16 %v395, %v394
  %v404 = vld [vmem:[%s5] sm:$0xf]
  %v405 = vld [vmem:[%s5 + $0x4] sm:$0xf]
  %v406 = vld [vmem:[%s5 + $0x8] sm:$0xf]
  %v407 = vld [vmem:[%s5 + $0xc] sm:$0xf]
  %v408 = vld [vmem:[%s5 + $0x10] sm:$0xf]
  %v409 = vld [vmem:[%s5 + $0x14] sm:$0xf]
  %v410 = vld [vmem:[%s5 + $0x18] sm:$0xf]
  %v411 = vld [vmem:[%s5 + $0x1c] sm:$0xf]
  %v412 = vld [vmem:[%s5 + $0x20] sm:$0xf]
  %v413 = vld [vmem:[%s5 + $0x24] sm:$0xf]
  %v414 = vld [vmem:[%s5 + $0x28] sm:$0xf]
  %v415 = vld [vmem:[%s5 + $0x2c] sm:$0xf]
  %v416 = vld [vmem:[%s5 + $0x30] sm:$0xf]
  %v417 = vld [vmem:[%s5 + $0x34] sm:$0xf]
  %v418 = vld [vmem:[%s5 + $0x38] sm:$0xf]
  %v419 = vld [vmem:[%s5 + $0x3c] sm:$0xf]
  %v420 = vld [vmem:[%s6] sm:$0x1]
  %v422 = vlaneseq
  %v423 = vshrl.u32 %v422, 7
  %v424 = vsub.s32 0, %v423
  %v425 = vrot.slane %v420, %v424
  %v443 = vunpack.c.l.b16 %v404
  %v444 = vunpack.c.l.b16 %v405
  %v445 = vunpack.c.l.b16 %v406
  %v446 = vunpack.c.l.b16 %v407
  %v447 = vunpack.c.l.b16 %v408
  %v448 = vunpack.c.l.b16 %v409
  %v449 = vunpack.c.l.b16 %v410
  %v450 = vunpack.c.l.b16 %v411
  %v451 = vunpack.c.l.b16 %v412
  %v452 = vunpack.c.l.b16 %v413
  %v453 = vunpack.c.l.b16 %v414
  %v454 = vunpack.c.l.b16 %v415
  %v455 = vunpack.c.l.b16 %v416
  %v456 = vunpack.c.l.b16 %v417
  %v457 = vunpack.c.l.b16 %v418
  %v458 = vunpack.c.l.b16 %v419
  %v459 = vpack.c.b16 %v444, %v443
  %v460 = vpack.c.b16 %v446, %v445
  %v461 = vpack.c.b16 %v448, %v447
  %v462 = vpack.c.b16 %v450, %v449
  %v463 = vpack.c.b16 %v452, %v451
  %v464 = vpack.c.b16 %v454, %v453
  %v465 = vpack.c.b16 %v456, %v455
  %v466 = vpack.c.b16 %v458, %v457
  %475 = vmatprep.subr.bf16.mxu0 0
  %476 = vmatpush1.bf16.msra.mxu0 %v459
  %477 = vmatprep.subr.bf16.mxu0 0
  %478 = vmatpush1.bf16.msra.mxu0 %v460
  %479 = vmatprep.subr.bf16.mxu0 0
  %480 = vmatpush1.bf16.msra.mxu0 %v461
  %481 = vmatprep.subr.bf16.mxu0 0
  %482 = vmatpush1.bf16.msra.mxu0 %v462
  %483 = vmatprep.subr.bf16.mxu0 0
  %484 = vmatpush1.bf16.msra.mxu0 %v463
  %485 = vmatprep.subr.bf16.mxu0 0
  %486 = vmatpush1.bf16.msra.mxu0 %v464
  %487 = vmatprep.subr.bf16.mxu0 0
  %488 = vmatpush1.bf16.msra.mxu0 %v465
  %489 = vmatprep.subr.bf16.mxu0 0
  %490 = vmatpush1.bf16.msra.mxu0 %v466
  %491 = vmatprep.subr.bf16.mxu0 0
  %492 = vmatpush1.bf16.msra.mxu0 0
  %493 = vmatprep.subr.bf16.mxu0 0
  %494 = vmatpush1.bf16.msra.mxu0 0
  %495 = vmatprep.subr.bf16.mxu0 0
  %496 = vmatpush1.bf16.msra.mxu0 0
  %497 = vmatprep.subr.bf16.mxu0 0
  %498 = vmatpush1.bf16.msra.mxu0 0
  %499 = vmatprep.subr.bf16.mxu0 0
  %500 = vmatpush1.bf16.msra.mxu0 0
  %501 = vmatprep.subr.bf16.mxu0 0
  %502 = vmatpush1.bf16.msra.mxu0 0
  %503 = vmatprep.subr.bf16.mxu0 0
  %504 = vmatpush1.bf16.msra.mxu0 0
  %505 = vmatprep.subr.bf16.mxu0 0
  %506 = vmatpush1.bf16.msra.mxu0 0
  %507 = vmatprep.mubr.bf16.mxu0 0
  %508 = vmatmul.mubr.bf16.gmra.mrb[0].mxu0 %v396
  %v509 = vpop.f32.mrb[0].mxu0
  %v510 = vadd.f32 %v425, %v509
  %v511 = vpop.f32.mrb[0].mxu0
  %v512 = vpop.f32.mrb[0].mxu0
  %v513 = vadd.f32 %v425, %v512
  %v514 = vpop.f32.mrb[0].mxu0
  %515 = vmatprep.mubr.bf16.mxu0 0
  %516 = vmatmul.mubr.bf16.gmra.mrb[0].mxu0 %v397
  %v517 = vpop.f32.mrb[0].mxu0
  %v518 = vadd.f32 %v425, %v517
  %v519 = vpop.f32.mrb[0].mxu0
  %v520 = vpop.f32.mrb[0].mxu0
  %v521 = vadd.f32 %v425, %v520
  %v522 = vpop.f32.mrb[0].mxu0
  %523 = vmatprep.mubr.bf16.mxu0 0
  %524 = vmatmul.mubr.bf16.gmra.mrb[0].mxu0 %v398
  %v525 = vpop.f32.mrb[0].mxu0
  %v526 = vadd.f32 %v425, %v525
  %v527 = vpop.f32.mrb[0].mxu0
  %v528 = vpop.f32.mrb[0].mxu0
  %v529 = vadd.f32 %v425, %v528
  %v530 = vpop.f32.mrb[0].mxu0
  %531 = vmatprep.mubr.bf16.mxu0 0
  %532 = vmatmul.mubr.bf16.gmra.mrb[0].mxu0 %v399
  %v533 = vpop.f32.mrb[0].mxu0
  %v534 = vadd.f32 %v425, %v533
  %v535 = vpop.f32.mrb[0].mxu0
  %v536 = vpop.f32.mrb[0].mxu0
  %v537 = vadd.f32 %v425, %v536
  %v538 = vpop.f32.mrb[0].mxu0
  %539 = vmatprep.mubr.bf16.mxu0 0
  %540 = vmatmul.mubr.bf16.gmra.mrb[0].mxu0 %v400
  %v541 = vpop.f32.mrb[0].mxu0
  %v542 = vadd.f32 %v425, %v541
  %v543 = vpop.f32.mrb[0].mxu0
  %v544 = vpop.f32.mrb[0].mxu0
  %v545 = vadd.f32 %v425, %v544
  %v546 = vpop.f32.mrb[0].mxu0
  %547 = vmatprep.mubr.bf16.mxu0 0
  %548 = vmatmul.mubr.bf16.gmra.mrb[0].mxu0 %v401
  %v549 = vpop.f32.mrb[0].mxu0
  %v550 = vadd.f32 %v425, %v549
  %v551 = vpop.f32.mrb[0].mxu0
  %v552 = vpop.f32.mrb[0].mxu0
  %v553 = vadd.f32 %v425, %v552
  %v554 = vpop.f32.mrb[0].mxu0
  %555 = vmatprep.mubr.bf16.mxu0 0
  %556 = vmatmul.mubr.bf16.gmra.mrb[0].mxu0 %v402
  %v557 = vpop.f32.mrb[0].mxu0
  %v558 = vadd.f32 %v425, %v557
  %v559 = vpop.f32.mrb[0].mxu0
  %v560 = vpop.f32.mrb[0].mxu0
  %v561 = vadd.f32 %v425, %v560
  %v562 = vpop.f32.mrb[0].mxu0
  %563 = vmatprep.mubr.bf16.mxu0 0
  %564 = vmatmul.mubr.bf16.gmra.mrb[0].mxu0 %v403
  %v565 = vpop.f32.mrb[0].mxu0
  %v566 = vadd.f32 %v425, %v565
  %v567 = vpop.f32.mrb[0].mxu0
  %v568 = vpop.f32.mrb[0].mxu0
  %v569 = vadd.f32 %v425, %v568
  %v570 = vpop.f32.mrb[0].mxu0
  %571 = vdwg.mxu0
  %vm572 = vcmask 80896
  %573 = vst.msk [vmem:[%s7] sm:$0xff] %vm572, %v510
  %574 = vst.msk [vmem:[%s7 + $0x8] sm:$0xff] %vm572, %v513
  %575 = vst.msk [vmem:[%s7 + $0x10] sm:$0xff] %vm572, %v518
  %576 = vst.msk [vmem:[%s7 + $0x18] sm:$0xff] %vm572, %v521
  %577 = vst.msk [vmem:[%s7 + $0x20] sm:$0xff] %vm572, %v526
  %578 = vst.msk [vmem:[%s7 + $0x28] sm:$0xff] %vm572, %v529
  %579 = vst.msk [vmem:[%s7 + $0x30] sm:$0xff] %vm572, %v534
  %580 = vst.msk [vmem:[%s7 + $0x38] sm:$0xff] %vm572, %v537
  %581 = vst.msk [vmem:[%s7 + $0x40] sm:$0xff] %vm572, %v542
  %582 = vst.msk [vmem:[%s7 + $0x48] sm:$0xff] %vm572, %v545
  %583 = vst.msk [vmem:[%s7 + $0x50] sm:$0xff] %vm572, %v550
  %584 = vst.msk [vmem:[%s7 + $0x58] sm:$0xff] %vm572, %v553
  %585 = vst.msk [vmem:[%s7 + $0x60] sm:$0xff] %vm572, %v558
  %586 = vst.msk [vmem:[%s7 + $0x68] sm:$0xff] %vm572, %v561
  %587 = vst.msk [vmem:[%s7 + $0x70] sm:$0xff] %vm572, %v566
  %588 = vst.msk [vmem:[%s7 + $0x78] sm:$0xff] %vm572, %v569
  // Predicated region
  $region30: #{mlp_forward.1} parent=0 // pred_check
    _
  $region31: #{mlp_forward.1} parent=0 // pred_check_branch
    %590 = sbr.rel (0) target = $region33
  $region32: #{mlp_forward.1} parent=0 // pred_region
    _
  $region33: #{mlp_forward.1} parent=0 // pred_fallthru
    _
  // Predicated region
  $region34: #{mlp_forward.1} parent=0 // pred_check
    _
  $region35: #{mlp_forward.1} parent=0 // pred_check_branch
    %592 = sbr.rel (0) target = $region37
  $region36: #{mlp_forward.1} parent=0 // pred_region
    _
  $region37: #{mlp_forward.1} parent=0 // pred_fallthru
    _

</llo_original>
